<compile_context>
chip_gen: v7x
topology: tpu7x:2x2x1
jax: 0.10.0
libtpu: 0.0.40
codegen_flags: <defaults>
</compile_context>

<pallas_src>
import functools
import math

import jax
import jax.numpy as jnp
from jax.experimental import pallas as pl
from jax.experimental.pallas import tpu as pltpu


def _round_up(x, m):
    return ((x + m - 1) // m) * m


def _nbytes(shape, dtype):
    n = 1
    for s in shape:
        n *= int(s)
    return n * jnp.dtype(dtype).itemsize


def _mlp_kernel(num_layers, compute_dtype, uT_ref, iT_ref, *refs):
    """Fused MLP over one batch tile (batch on the lane axis).

    refs = (w0_user, w0_item, b0, w1, b1, ..., out_ref).
    Weights are [out, in] (PyTorch orientation); activations are [feat, TB].
    """
    out_ref = refs[-1]
    layer_refs = refs[:-1]

    u = uT_ref[...]           # [D, TB], compute_dtype (scalar bias folded in)
    it = iT_ref[...]          # [D, TB]

    # First layer: cat([u, i], -1) @ W0.T + b0  ==  W0u @ u + W0i @ i + b0.
    w0u = layer_refs[0][...]  # [h0, D]
    w0i = layer_refs[1][...]  # [h0, D]
    b0 = layer_refs[2][...]   # [h0, 1] f32; broadcasts along lanes
    h = (
        jnp.dot(w0u, u, preferred_element_type=jnp.float32)
        + jnp.dot(w0i, it, preferred_element_type=jnp.float32)
        + b0
    )
    h = jnp.maximum(h, 0.0)   # f32 elementwise (v5e-friendly)

    # Remaining Linear + ReLU layers (static Python loop, unrolled at trace).
    for layer in range(1, num_layers):
        w = layer_refs[3 + 2 * (layer - 1)][...]       # [d_out, d_in]
        b = layer_refs[3 + 2 * (layer - 1) + 1][...]   # [d_out, 1] f32
        h = jnp.dot(w, h.astype(compute_dtype),
                    preferred_element_type=jnp.float32) + b
        h = jnp.maximum(h, 0.0)

    out_ref[...] = h.astype(out_ref.dtype)


def mlp_forward_pallas(user_ids, item_ids, params, *, batch_tile=512,
                       compute_dtype=jnp.bfloat16):
    """MLP forward: gathers in JAX glue, fused batch-tiled MLP in Pallas."""
    # Fold the scalar biases into the embedding rows (removes [B,1] operands).
    ue = (jnp.take(params["user_embedding"], user_ids, axis=0)
          + jnp.take(params["user_biases"], user_ids, axis=0))   # [B, D] f32
    ie = (jnp.take(params["item_embedding"], item_ids, axis=0)
          + jnp.take(params["item_biases"], item_ids, axis=0))   # [B, D] f32

    weights = params["hidden_weights"]   # list of [d_out, d_in] (torch layout)
    biases = params["hidden_biases"]     # list of [d_out]
    num_layers = len(weights)
    B, D = ue.shape

    if num_layers == 0:
        # No hidden layers: forward is just the concatenation.
        return jnp.concatenate([ue, ie], axis=-1)

    out_dim = int(weights[-1].shape[0])

    # Batch tile: multiple of 128 so batch sits densely on the lane axis.
    TB = min(batch_tile, _round_up(B, 128))
    B_pad = _round_up(B, TB)
    pad = B_pad - B

    # Transpose to batch-on-lanes layout and cast matmul operands to bf16.
    uT = jnp.pad(ue, ((0, pad), (0, 0))).T.astype(compute_dtype)  # [D, B_pad]
    iT = jnp.pad(ie, ((0, pad), (0, 0))).T.astype(compute_dtype)  # [D, B_pad]

    # Pre-split W0 into user/item halves on the host (no in-kernel slicing).
    w0 = weights[0].astype(compute_dtype)                  # [h0, 2D]
    layer_args = [w0[:, :D], w0[:, D:],
                  biases[0].reshape(-1, 1).astype(jnp.float32)]
    for w, b in zip(weights[1:], biases[1:]):
        layer_args.append(w.astype(compute_dtype))
        layer_args.append(b.reshape(-1, 1).astype(jnp.float32))

    grid = (B_pad // TB,)

    def batch_tiled(rows):
        return pl.BlockSpec((rows, TB), lambda i: (0, i))

    def resident(arr):
        # Full-array block + constant index_map -> stays in VMEM across steps.
        return pl.BlockSpec(arr.shape, lambda i: (0, 0))

    in_specs = ([batch_tiled(D), batch_tiled(D)]
                + [resident(a) for a in layer_args])
    out_specs = pl.BlockSpec((out_dim, TB), lambda i: (0, i))

    # Explicit VMEM budget: 2 pipelined input tiles (double-buffered), output
    # double buffer, resident weights; 2x headroom, clamped well under the
    # 64 MiB physical VMEM of v7x.
    cd_bytes = jnp.dtype(compute_dtype).itemsize
    tile_in_bytes = D * TB * cd_bytes
    tile_out_bytes = out_dim * TB * 4
    resident_bytes = sum(_nbytes(a.shape, a.dtype) for a in layer_args)
    vmem_budget = 2 * 2 * tile_in_bytes + 2 * tile_out_bytes + 2 * resident_bytes
    vmem_budget = int(2 * vmem_budget) + (1 << 20)
    vmem_budget = max(4 << 20, min(vmem_budget, 48 << 20))

    flops = 2 * B_pad * sum(int(w.shape[0]) * int(w.shape[1]) for w in weights)
    bytes_accessed = (_nbytes(uT.shape, uT.dtype) + _nbytes(iT.shape, iT.dtype)
                      + resident_bytes + out_dim * B_pad * 4)

    kernel = functools.partial(_mlp_kernel, num_layers, compute_dtype)
    out_t = pl.pallas_call(
        kernel,
        out_shape=jax.ShapeDtypeStruct((out_dim, B_pad), jnp.float32),
        grid=grid,
        in_specs=in_specs,
        out_specs=out_specs,
        compiler_params=pltpu.CompilerParams(
            dimension_semantics=("parallel",),      # shard batch tiles on v7x
            vmem_limit_bytes=vmem_budget,
        ),
        cost_estimate=pl.CostEstimate(
            flops=flops, transcendentals=0, bytes_accessed=bytes_accessed),
    )(uT, iT, *layer_args)

    # Back to [B, out_dim]; drop batch padding.
    return out_t.T[:B]


def init_params(key, user_count, item_count, embedding_dim, hidden_dims):
    """Deterministic init mirroring the PyTorch module's __init__."""
    keys = jax.random.split(key, 2 + 2 * len(hidden_dims))

    def xavier_normal(k, shape):
        fan_a, fan_b = shape[0], shape[1]
        std = math.sqrt(2.0 / (fan_a + fan_b))
        return std * jax.random.normal(k, shape, dtype=jnp.float32)

    params = {
        "user_embedding": xavier_normal(keys[0], (user_count, embedding_dim)),
        "item_embedding": xavier_normal(keys[1], (item_count, embedding_dim)),
        "user_biases": jnp.zeros((user_count, 1), jnp.float32),
        "item_biases": jnp.zeros((item_count, 1), jnp.float32),
        "hidden_weights": [],   # PyTorch orientation: [d_out, d_in]
        "hidden_biases": [],    # [d_out]
    }
    full_dims = [2 * embedding_dim] + list(hidden_dims)
    for i, (d_in, d_out) in enumerate(zip(full_dims[:-1], full_dims[1:])):
        wk, bk = keys[2 + 2 * i], keys[3 + 2 * i]
        params["hidden_weights"].append(xavier_normal(wk, (d_out, d_in)))
        params["hidden_biases"].append(
            0.001 * jax.random.normal(bk, (d_out,), dtype=jnp.float32))
    return params


def mlp_forward_reference(user_ids, item_ids, params):
    """Pure-JAX f32 reference matching the PyTorch forward exactly."""
    ue = (jnp.take(params["user_embedding"], user_ids, axis=0)
          + jnp.take(params["user_biases"], user_ids, axis=0))
    ie = (jnp.take(params["item_embedding"], item_ids, axis=0)
          + jnp.take(params["item_biases"], item_ids, axis=0))
    h = jnp.concatenate([ue, ie], axis=-1)
    for w, b in zip(params["hidden_weights"], params["hidden_biases"]):
        h = jnp.maximum(h @ w.T + b, 0.0)
    return h


if __name__ == "__main__":
    USER_COUNT = 12
    ITEM_COUNT = 20
    EMBEDDING_DIM = 16
    HIDDEN_DIMS = [32, 16]
    BATCH = 8

    key = jax.random.PRNGKey(0)
    pkey, ukey, ikey = jax.random.split(key, 3)
    params = init_params(pkey, USER_COUNT, ITEM_COUNT, EMBEDDING_DIM, HIDDEN_DIMS)

    user_ids = jax.random.randint(ukey, (BATCH,), 0, USER_COUNT, dtype=jnp.int32)
    item_ids = jax.random.randint(ikey, (BATCH,), 0, ITEM_COUNT, dtype=jnp.int32)

    # jit so the gather/pad/transpose glue fuses with the pallas_call.
    mlp_jit = jax.jit(lambda u, i, p: mlp_forward_pallas(u, i, p))
    out = mlp_jit(user_ids, item_ids, params)
    out = jax.block_until_ready(out)

    ref = mlp_forward_reference(user_ids, item_ids, params)
    assert out.shape == (BATCH, HIDDEN_DIMS[-1])
    # bf16 matmul operands with f32 accumulation -> loosened tolerance.
    assert jnp.allclose(out, ref, atol=5e-2, rtol=5e-2), (
        float(jnp.max(jnp.abs(out - ref))))

    print("KERNEL_OK")
</pallas_src>

<mosaic_0001>
module attributes {stable_mosaic.version = 11 : i64} {
  func.func @_mlp_kernel(%arg0: i32, %arg1: memref<16x128xbf16, #tpu.memory_space<vmem>>, %arg2: memref<16x128xbf16, #tpu.memory_space<vmem>>, %arg3: memref<32x16xbf16, #tpu.memory_space<vmem>>, %arg4: memref<32x16xbf16, #tpu.memory_space<vmem>>, %arg5: memref<32x1xf32, #tpu.memory_space<vmem>>, %arg6: memref<16x32xbf16, #tpu.memory_space<vmem>>, %arg7: memref<16x1xf32, #tpu.memory_space<vmem>>, %arg8: memref<16x128xf32, #tpu.memory_space<vmem>>) attributes {dimension_semantics = [#tpu.dimension_semantics<parallel>], iteration_bounds = array<i64: 1>, scalar_prefetch = 0 : i64, scratch_operands = 0 : i64, tpu.core_type = #tpu.core_type<tc>, window_params = [{transform_indices = @transform_0, window_bounds = array<i64: 16, 128>}, {transform_indices = @transform_1, window_bounds = array<i64: 16, 128>}, {pipeline_mode = #tpu.pipeline_mode<synchronous>, transform_indices = @transform_2, window_bounds = array<i64: 32, 16>}, {pipeline_mode = #tpu.pipeline_mode<synchronous>, transform_indices = @transform_3, window_bounds = array<i64: 32, 16>}, {pipeline_mode = #tpu.pipeline_mode<synchronous>, transform_indices = @transform_4, window_bounds = array<i64: 32, 1>}, {pipeline_mode = #tpu.pipeline_mode<synchronous>, transform_indices = @transform_5, window_bounds = array<i64: 16, 32>}, {pipeline_mode = #tpu.pipeline_mode<synchronous>, transform_indices = @transform_6, window_bounds = array<i64: 16, 1>}, {transform_indices = @transform_7, window_bounds = array<i64: 16, 128>}]} {
    %c0 = arith.constant 0 : index
    %c0_0 = arith.constant 0 : index
    %0 = vector.load %arg1[%c0, %c0_0] : memref<16x128xbf16, #tpu.memory_space<vmem>>, vector<16x128xbf16>
    %c0_1 = arith.constant 0 : index
    %c0_2 = arith.constant 0 : index
    %1 = vector.load %arg2[%c0_1, %c0_2] : memref<16x128xbf16, #tpu.memory_space<vmem>>, vector<16x128xbf16>
    %c0_3 = arith.constant 0 : index
    %c0_4 = arith.constant 0 : index
    %2 = vector.load %arg3[%c0_3, %c0_4] : memref<32x16xbf16, #tpu.memory_space<vmem>>, vector<32x16xbf16>
    %c0_5 = arith.constant 0 : index
    %c0_6 = arith.constant 0 : index
    %3 = vector.load %arg4[%c0_5, %c0_6] : memref<32x16xbf16, #tpu.memory_space<vmem>>, vector<32x16xbf16>
    %c0_7 = arith.constant 0 : index
    %c0_8 = arith.constant 0 : index
    %4 = vector.load %arg5[%c0_7, %c0_8] : memref<32x1xf32, #tpu.memory_space<vmem>>, vector<32x1xf32>
    %cst = arith.constant dense<0.000000e+00> : vector<32x128xf32>
    %5 = tpu.matmul %2, %0, %cst {dimension_numbers = #tpu.dot_dimension_numbers<[1], [0], [0], [1], [0, 0, 1, 1], [], []>} : vector<32x16xbf16>, vector<16x128xbf16>, vector<32x128xf32> -> vector<32x128xf32>
    %cst_9 = arith.constant dense<0.000000e+00> : vector<32x128xf32>
    %6 = tpu.matmul %3, %1, %cst_9 {dimension_numbers = #tpu.dot_dimension_numbers<[1], [0], [0], [1], [0, 0, 1, 1], [], []>} : vector<32x16xbf16>, vector<16x128xbf16>, vector<32x128xf32> -> vector<32x128xf32>
    %7 = arith.addf %5, %6 : vector<32x128xf32>
    %8 = vector.broadcast %4 : vector<32x1xf32> to vector<32x128xf32>
    %9 = arith.addf %7, %8 : vector<32x128xf32>
    %cst_10 = arith.constant 0.000000e+00 : f32
    %10 = vector.broadcast %cst_10 : f32 to vector<32x128xf32>
    %11 = arith.maximumf %9, %10 : vector<32x128xf32>
    %c0_11 = arith.constant 0 : index
    %c0_12 = arith.constant 0 : index
    %12 = vector.load %arg6[%c0_11, %c0_12] : memref<16x32xbf16, #tpu.memory_space<vmem>>, vector<16x32xbf16>
    %c0_13 = arith.constant 0 : index
    %c0_14 = arith.constant 0 : index
    %13 = vector.load %arg7[%c0_13, %c0_14] : memref<16x1xf32, #tpu.memory_space<vmem>>, vector<16x1xf32>
    %14 = arith.truncf %11 : vector<32x128xf32> to vector<32x128xbf16>
    %cst_15 = arith.constant dense<0.000000e+00> : vector<16x128xf32>
    %15 = tpu.matmul %12, %14, %cst_15 {dimension_numbers = #tpu.dot_dimension_numbers<[1], [0], [0], [1], [0, 0, 1, 1], [], []>} : vector<16x32xbf16>, vector<32x128xbf16>, vector<16x128xf32> -> vector<16x128xf32>
    %16 = vector.broadcast %13 : vector<16x1xf32> to vector<16x128xf32>
    %17 = arith.addf %15, %16 : vector<16x128xf32>
    %cst_16 = arith.constant 0.000000e+00 : f32
    %18 = vector.broadcast %cst_16 : f32 to vector<16x128xf32>
    %19 = arith.maximumf %17, %18 : vector<16x128xf32>
    %c0_17 = arith.constant 0 : index
    %c0_18 = arith.constant 0 : index
    %20 = vector.load %arg8[%c0_17, %c0_18] : memref<16x128xf32, #tpu.memory_space<vmem>>, vector<16x128xf32>
    tpu.vector_store %arg8[%c0_17, %c0_18], %19 {strides = array<i32>} : memref<16x128xf32, #tpu.memory_space<vmem>>, vector<16x128xf32>,
    return
  }
  func.func @transform_0(%arg0: i32) -> (i32, i32) {
    %c0_i32 = arith.constant 0 : i32
    %c0_i32_0 = arith.constant 0 : i32
    return %c0_i32, %arg0 : i32, i32
  }
  func.func @transform_1(%arg0: i32) -> (i32, i32) {
    %c0_i32 = arith.constant 0 : i32
    %c0_i32_0 = arith.constant 0 : i32
    return %c0_i32, %arg0 : i32, i32
  }
  func.func @transform_2(%arg0: i32) -> (i32, i32) {
    %c0_i32 = arith.constant 0 : i32
    %c0_i32_0 = arith.constant 0 : i32
    %c0_i32_1 = arith.constant 0 : i32
    return %c0_i32, %c0_i32_0 : i32, i32
  }
  func.func @transform_3(%arg0: i32) -> (i32, i32) {
    %c0_i32 = arith.constant 0 : i32
    %c0_i32_0 = arith.constant 0 : i32
    %c0_i32_1 = arith.constant 0 : i32
    return %c0_i32, %c0_i32_0 : i32, i32
  }
  func.func @transform_4(%arg0: i32) -> (i32, i32) {
    %c0_i32 = arith.constant 0 : i32
    %c0_i32_0 = arith.constant 0 : i32
    %c0_i32_1 = arith.constant 0 : i32
    return %c0_i32, %c0_i32_0 : i32, i32
  }
  func.func @transform_5(%arg0: i32) -> (i32, i32) {
    %c0_i32 = arith.constant 0 : i32
    %c0_i32_0 = arith.constant 0 : i32
    %c0_i32_1 = arith.constant 0 : i32
    return %c0_i32, %c0_i32_0 : i32, i32
  }
  func.func @transform_6(%arg0: i32) -> (i32, i32) {
    %c0_i32 = arith.constant 0 : i32
    %c0_i32_0 = arith.constant 0 : i32
    %c0_i32_1 = arith.constant 0 : i32
    return %c0_i32, %c0_i32_0 : i32, i32
  }
  func.func @transform_7(%arg0: i32) -> (i32, i32) {
    %c0_i32 = arith.constant 0 : i32
    %c0_i32_0 = arith.constant 0 : i32
    return %c0_i32, %arg0 : i32, i32
  }
}

</mosaic_0001>

<llo_original>
// kernel: _lambda_.1
$region0: #{_lambda_.1}
  #allocation0 [shape = 'u32[]', space=smem, size = 0x4, offset = 0x4, fixed_abs, tag = 'smem constant byte address 0x4 - core index']
  #allocation1 [shape = 'u32[144,128]{1,0:T(1,128)}', space=vmem, size = 0x12000, scoped, tag = 'internal scratch']
  %s0 = inlined_call_operand.vmem [shape: bf16[16,128], index: 0, kind: input, shape index: {}]
  %s1 = inlined_call_operand.vmem [shape: bf16[16,128], index: 1, kind: input, shape index: {}]
  %s2 = inlined_call_operand.vmem [shape: bf16[32,16], index: 2, kind: input, shape index: {}]
  %s3 = inlined_call_operand.vmem [shape: bf16[32,16], index: 3, kind: input, shape index: {}]
  %s4 = inlined_call_operand.vmem [shape: f32[32,1], index: 4, kind: input, shape index: {}]
  %s5 = inlined_call_operand.vmem [shape: bf16[16,32], index: 5, kind: input, shape index: {}]
  %s6 = inlined_call_operand.vmem [shape: f32[16,1], index: 6, kind: input, shape index: {}]
  %s7 = inlined_call_operand.vmem [shape: f32[16,128], index: 7, kind: output, shape index: {}]
  %s8 = sld [smem:[#allocation0]]
  $region38: #{_lambda_.1} parent=0
    _
  %s10 = ssub.s32 1, %s8
  %s11 = scalar_select 0, %s10, %s8
  // Predicated region
  $region2: #{_lambda_.1} parent=0 // pred_check
    _
  $region3: #{_lambda_.1} parent=0 // pred_check_branch
    %13 = sbr.rel (0) target = $region5
  $region4: #{_lambda_.1} parent=0 // pred_region
    _
  $region5: #{_lambda_.1} parent=0 // pred_fallthru
    _
  // Predicated region
  $region6: #{_lambda_.1} parent=0 // pred_check
    _
  $region7: #{_lambda_.1} parent=0 // pred_check_branch
    %15 = sbr.rel (0) target = $region9
  $region8: #{_lambda_.1} parent=0 // pred_region
    _
  $region9: #{_lambda_.1} parent=0 // pred_fallthru
    _
  // Predicated region
  $region10: #{_lambda_.1} parent=0 // pred_check
    _
  $region11: #{_lambda_.1} parent=0 // pred_check_branch
    %17 = sbr.rel (0) target = $region13
  $region12: #{_lambda_.1} parent=0 // pred_region
    _
  $region13: #{_lambda_.1} parent=0 // pred_fallthru
    _
  // Predicated region
  $region14: #{_lambda_.1} parent=0 // pred_check
    _
  $region15: #{_lambda_.1} parent=0 // pred_check_branch
    %19 = sbr.rel (0) target = $region17
  $region16: #{_lambda_.1} parent=0 // pred_region
    _
  $region17: #{_lambda_.1} parent=0 // pred_fallthru
    _
  // Predicated region
  $region18: #{_lambda_.1} parent=0 // pred_check
    _
  $region19: #{_lambda_.1} parent=0 // pred_check_branch
    %21 = sbr.rel (0) target = $region21
  $region20: #{_lambda_.1} parent=0 // pred_region
    _
  $region21: #{_lambda_.1} parent=0 // pred_fallthru
    _
  // Predicated region
  $region22: #{_lambda_.1} parent=0 // pred_check
    _
  $region23: #{_lambda_.1} parent=0 // pred_check_branch
    %23 = sbr.rel (0) target = $region25
  $region24: #{_lambda_.1} parent=0 // pred_region
    _
  $region25: #{_lambda_.1} parent=0 // pred_fallthru
    _
  // Predicated region
  $region26: #{_lambda_.1} parent=0 // pred_check
    _
  $region27: #{_lambda_.1} parent=0 // pred_check_branch
    %25 = sbr.rel (0) target = $region29
  $region28: #{_lambda_.1} parent=0 // pred_region
    _
  $region29: #{_lambda_.1} parent=0 // pred_fallthru
    _
  %v27 = vld [vmem:[%s0] sm:$0xf]
  %v28 = vld [vmem:[%s0 + $0x4] sm:$0xf]
  %v29 = vld [vmem:[%s1] sm:$0xf]
  %v30 = vld [vmem:[%s1 + $0x4] sm:$0xf]
  %v31 = vld [vmem:[%s2] sm:$0xf]
  %v32 = vld [vmem:[%s2 + $0x4] sm:$0xf]
  %v33 = vld [vmem:[%s2 + $0x8] sm:$0xf]
  %v34 = vld [vmem:[%s2 + $0xc] sm:$0xf]
  %v35 = vld [vmem:[%s3] sm:$0xf]
  %v36 = vld [vmem:[%s3 + $0x4] sm:$0xf]
  %v37 = vld [vmem:[%s3 + $0x8] sm:$0xf]
  %v38 = vld [vmem:[%s3 + $0xc] sm:$0xf]
  %v39 = vld [vmem:[%s4] sm:$0xff]
  %v40 = vld [vmem:[%s4 + $0x8] sm:$0xff]
  %v41 = vld [vmem:[%s4 + $0x10] sm:$0xff]
  %v42 = vld [vmem:[%s4 + $0x18] sm:$0xff]
  %v47 = vunpack.c.l.b16 %v35
  %v48 = vunpack.c.l.b16 %v36
  %v49 = vunpack.c.l.b16 %v37
  %v50 = vunpack.c.l.b16 %v38
  %v51 = vpack.c.b16 %v48, %v47
  %v52 = vpack.c.b16 %v50, %v49
  %v55 = vunpack.c.l.b16 %v29
  %v56 = vunpack.c.l.b16 %v30
  %v57 = vpack.c.b16 %v56, %v55
  %vm59 = vcmask 130048
  %v61 = vsel %vm59, %v51, 0
  %v64 = vsel %vm59, %v52, 0
  %66 = vmatprep.subr.bf16.mxu0 0
  %67 = vmatpush1.bf16.msra.mxu0 %v57
  %68 = vmatprep.subr.bf16.mxu0 0
  %69 = vmatpush1.bf16.msra.mxu0 0
  %70 = vmatprep.subr.bf16.mxu0 0
  %71 = vmatpush1.bf16.msra.mxu0 0
  %72 = vmatprep.subr.bf16.mxu0 0
  %73 = vmatpush1.bf16.msra.mxu0 0
  %74 = vmatprep.subr.bf16.mxu0 0
  %75 = vmatpush1.bf16.msra.mxu0 0
  %76 = vmatprep.subr.bf16.mxu0 0
  %77 = vmatpush1.bf16.msra.mxu0 0
  %78 = vmatprep.subr.bf16.mxu0 0
  %79 = vmatpush1.bf16.msra.mxu0 0
  %80 = vmatprep.subr.bf16.mxu0 0
  %81 = vmatpush1.bf16.msra.mxu0 0
  %82 = vmatprep.subr.bf16.mxu0 0
  %83 = vmatpush1.bf16.msra.mxu0 0
  %84 = vmatprep.subr.bf16.mxu0 0
  %85 = vmatpush1.bf16.msra.mxu0 0
  %86 = vmatprep.subr.bf16.mxu0 0
  %87 = vmatpush1.bf16.msra.mxu0 0
  %88 = vmatprep.subr.bf16.mxu0 0
  %89 = vmatpush1.bf16.msra.mxu0 0
  %90 = vmatprep.subr.bf16.mxu0 0
  %91 = vmatpush1.bf16.msra.mxu0 0
  %92 = vmatprep.subr.bf16.mxu0 0
  %93 = vmatpush1.bf16.msra.mxu0 0
  %94 = vmatprep.subr.bf16.mxu0 0
  %95 = vmatpush1.bf16.msra.mxu0 0
  %96 = vmatprep.subr.bf16.mxu0 0
  %97 = vmatpush1.bf16.msra.mxu0 0
  %98 = vmatprep.mubr.bf16.mxu0 0
  %99 = vmatmul.mubr.bf16.gmra.mrb[0].mxu0 %v61
  %v100 = vpop.f32.mrb[0].mxu0
  %v101 = vadd.f32 0.0, %v100
  %v102 = vpop.f32.mrb[0].mxu0
  %v103 = vpop.f32.mrb[0].mxu0
  %v104 = vadd.f32 0.0, %v103
  %v105 = vpop.f32.mrb[0].mxu0
  %106 = vmatprep.mubr.bf16.mxu0 0
  %107 = vmatmul.mubr.bf16.gmra.mrb[0].mxu0 %v64
  %v108 = vpop.f32.mrb[0].mxu0
  %v109 = vadd.f32 0.0, %v108
  %v110 = vpop.f32.mrb[0].mxu0
  %v111 = vpop.f32.mrb[0].mxu0
  %v112 = vadd.f32 0.0, %v111
  %v113 = vpop.f32.mrb[0].mxu0
  %114 = vdwg.mxu0
  %v119 = vunpack.c.l.b16 %v31
  %v120 = vunpack.c.l.b16 %v32
  %v121 = vunpack.c.l.b16 %v33
  %v122 = vunpack.c.l.b16 %v34
  %v123 = vpack.c.b16 %v120, %v119
  %v124 = vpack.c.b16 %v122, %v121
  %v127 = vunpack.c.l.b16 %v27
  %v128 = vunpack.c.l.b16 %v28
  %v129 = vpack.c.b16 %v128, %v127
  %v132 = vsel %vm59, %v123, 0
  %v135 = vsel %vm59, %v124, 0
  %137 = vmatprep.subr.bf16.mxu0 0
  %138 = vmatpush1.bf16.msra.mxu0 %v129
  %139 = vmatprep.subr.bf16.mxu0 0
  %140 = vmatpush1.bf16.msra.mxu0 0
  %141 = vmatprep.subr.bf16.mxu0 0
  %142 = vmatpush1.bf16.msra.mxu0 0
  %143 = vmatprep.subr.bf16.mxu0 0
  %144 = vmatpush1.bf16.msra.mxu0 0
  %145 = vmatprep.subr.bf16.mxu0 0
  %146 = vmatpush1.bf16.msra.mxu0 0
  %147 = vmatprep.subr.bf16.mxu0 0
  %148 = vmatpush1.bf16.msra.mxu0 0
  %149 = vmatprep.subr.bf16.mxu0 0
  %150 = vmatpush1.bf16.msra.mxu0 0
  %151 = vmatprep.subr.bf16.mxu0 0
  %152 = vmatpush1.bf16.msra.mxu0 0
  %153 = vmatprep.subr.bf16.mxu0 0
  %154 = vmatpush1.bf16.msra.mxu0 0
  %155 = vmatprep.subr.bf16.mxu0 0
  %156 = vmatpush1.bf16.msra.mxu0 0
  %157 = vmatprep.subr.bf16.mxu0 0
  %158 = vmatpush1.bf16.msra.mxu0 0
  %159 = vmatprep.subr.bf16.mxu0 0
  %160 = vmatpush1.bf16.msra.mxu0 0
  %161 = vmatprep.subr.bf16.mxu0 0
  %162 = vmatpush1.bf16.msra.mxu0 0
  %163 = vmatprep.subr.bf16.mxu0 0
  %164 = vmatpush1.bf16.msra.mxu0 0
  %165 = vmatprep.subr.bf16.mxu0 0
  %166 = vmatpush1.bf16.msra.mxu0 0
  %167 = vmatprep.subr.bf16.mxu0 0
  %168 = vmatpush1.bf16.msra.mxu0 0
  %169 = vmatprep.mubr.bf16.mxu0 0
  %170 = vmatmul.mubr.bf16.gmra.mrb[0].mxu0 %v132
  %v171 = vpop.f32.mrb[0].mxu0
  %v172 = vadd.f32 %v101, %v171
  %v173 = vpop.f32.mrb[0].mxu0
  %v174 = vpop.f32.mrb[0].mxu0
  %v175 = vadd.f32 %v104, %v174
  %v176 = vpop.f32.mrb[0].mxu0
  %177 = vmatprep.mubr.bf16.mxu0 0
  %178 = vmatmul.mubr.bf16.gmra.mrb[0].mxu0 %v135
  %v179 = vpop.f32.mrb[0].mxu0
  %v180 = vadd.f32 %v109, %v179
  %v181 = vpop.f32.mrb[0].mxu0
  %v182 = vpop.f32.mrb[0].mxu0
  %v183 = vadd.f32 %v112, %v182
  %v184 = vpop.f32.mrb[0].mxu0
  %185 = vdwg.mxu0
  %187 = vset.pattern.permute.xlu0 0
  %188 = vperm.xlu0 %187, %v39
  %v189 = vpop.permute.xlu0 %188
  %192 = vset.pattern.permute.xlu0 0
  %193 = vperm.xlu0 %192, %v40
  %v194 = vpop.permute.xlu0 %193
  %197 = vset.pattern.permute.xlu0 0
  %198 = vperm.xlu0 %197, %v41
  %v199 = vpop.permute.xlu0 %198
  %202 = vset.pattern.permute.xlu0 0
  %203 = vperm.xlu0 %202, %v42
  %v204 = vpop.permute.xlu0 %203
  %v206 = vadd.f32 %v172, %v189
  %v207 = vadd.f32 %v175, %v194
  %v208 = vadd.f32 %v180, %v199
  %v209 = vadd.f32 %v183, %v204
  %v210 = vmax.f32 %v206, 0.0
  %v211 = vmax.f32 %v207, 0.0
  %v212 = vmax.f32 %v208, 0.0
  %v213 = vmax.f32 %v209, 0.0
  %v214 = vld [vmem:[%s5] sm:$0xf]
  %v215 = vld [vmem:[%s5 + $0x4] sm:$0xf]
  %v216 = vld [vmem:[%s6] sm:$0xff]
  %v217 = vld [vmem:[%s6 + $0x8] sm:$0xff]
  %v218 = vpack.c.bf16 %v211, %v210
  %v219 = vpack.c.bf16 %v213, %v212
  %221 = vset.pattern.permute.xlu0 0
  %222 = vperm.xlu0 %221, %v216
  %v223 = vpop.permute.xlu0 %222
  %226 = vset.pattern.permute.xlu0 0
  %227 = vperm.xlu0 %226, %v217
  %v228 = vpop.permute.xlu0 %227
  %v232 = vunpack.c.l.b16 %v214
  %v233 = vunpack.c.l.b16 %v215
  %v234 = vpack.c.b16 %v233, %v232
  %vm235 = vcmask 261120
  %v237 = vsel %vm235, %v234, 0
  %239 = vmatprep.subr.bf16.mxu0 0
  %240 = vmatpush1.bf16.msra.mxu0 %v218
  %241 = vmatprep.subr.bf16.mxu0 0
  %242 = vmatpush1.bf16.msra.mxu0 %v219
  %243 = vmatprep.subr.bf16.mxu0 0
  %244 = vmatpush1.bf16.msra.mxu0 0
  %245 = vmatprep.subr.bf16.mxu0 0
  %246 = vmatpush1.bf16.msra.mxu0 0
  %247 = vmatprep.subr.bf16.mxu0 0
  %248 = vmatpush1.bf16.msra.mxu0 0
  %249 = vmatprep.subr.bf16.mxu0 0
  %250 = vmatpush1.bf16.msra.mxu0 0
  %251 = vmatprep.subr.bf16.mxu0 0
  %252 = vmatpush1.bf16.msra.mxu0 0
  %253 = vmatprep.subr.bf16.mxu0 0
  %254 = vmatpush1.bf16.msra.mxu0 0
  %255 = vmatprep.subr.bf16.mxu0 0
  %256 = vmatpush1.bf16.msra.mxu0 0
  %257 = vmatprep.subr.bf16.mxu0 0
  %258 = vmatpush1.bf16.msra.mxu0 0
  %259 = vmatprep.subr.bf16.mxu0 0
  %260 = vmatpush1.bf16.msra.mxu0 0
  %261 = vmatprep.subr.bf16.mxu0 0
  %262 = vmatpush1.bf16.msra.mxu0 0
  %263 = vmatprep.subr.bf16.mxu0 0
  %264 = vmatpush1.bf16.msra.mxu0 0
  %265 = vmatprep.subr.bf16.mxu0 0
  %266 = vmatpush1.bf16.msra.mxu0 0
  %267 = vmatprep.subr.bf16.mxu0 0
  %268 = vmatpush1.bf16.msra.mxu0 0
  %269 = vmatprep.subr.bf16.mxu0 0
  %270 = vmatpush1.bf16.msra.mxu0 0
  %271 = vmatprep.mubr.bf16.mxu0 0
  %272 = vmatmul.mubr.bf16.gmra.mrb[0].mxu0 %v237
  %v273 = vpop.f32.mrb[0].mxu0
  %v274 = vadd.f32 %v223, %v273
  %v275 = vpop.f32.mrb[0].mxu0
  %v276 = vpop.f32.mrb[0].mxu0
  %v277 = vadd.f32 %v228, %v276
  %v278 = vpop.f32.mrb[0].mxu0
  %279 = vdwg.mxu0
  %v280 = vmax.f32 %v274, 0.0
  %v281 = vmax.f32 %v277, 0.0
  %282 = vst [vmem:[%s7] sm:$0xff] %v280
  %283 = vst [vmem:[%s7 + $0x8] sm:$0xff] %v281
  // Predicated region
  $region30: #{_lambda_.1} parent=0 // pred_check
    _
  $region31: #{_lambda_.1} parent=0 // pred_check_branch
    %285 = sbr.rel (0) target = $region33
  $region32: #{_lambda_.1} parent=0 // pred_region
    _
  $region33: #{_lambda_.1} parent=0 // pred_fallthru
    _
  // Predicated region
  $region34: #{_lambda_.1} parent=0 // pred_check
    _
  $region35: #{_lambda_.1} parent=0 // pred_check_branch
    %287 = sbr.rel (0) target = $region37
  $region36: #{_lambda_.1} parent=0 // pred_region
    _
  $region37: #{_lambda_.1} parent=0 // pred_fallthru
    _

</llo_original>
